<compile_context>
chip_gen: v6e
topology: v6e:2x2x1
jax: 0.10.0
libtpu: 0.0.40
codegen_flags: <defaults>
</compile_context>

<pallas_src>
import functools

import jax
import jax.numpy as jnp
from jax.experimental import pallas as pl
from jax.experimental.pallas import tpu as pltpu

BN_EPS = 1e-5
LANE = 128
VMEM_LIMIT_BYTES = 32 * 1024 * 1024  # explicit; safe on v5e/v6e (128 MiB) and v7x (64 MiB)


def _round_up(x, m):
    return (x + m - 1) // m * m


def _conv_stats_kernel(patches_ref, w_ref, gamma_ref, beta_ref,
                       y_ref, ss_ref, sum_ref, sq_ref, *, inv_m):
    """Pass 1: conv tile (MXU) + per-channel sum / sumsq accumulation.

    patches: (TM, K) bf16   w: (K, Cpad) bf16   gamma/beta: (1, Cpad) f32
    y:       (TM, Cpad) f32 (raw conv output, bias-free)
    ss:      (2, Cpad) f32  (row 0 = scale, row 1 = shift), written on last tile
    sum/sq:  (1, Cpad) f32 VMEM scratch accumulators
    """
    i = pl.program_id(0)

    @pl.when(i == 0)
    def _():
        sum_ref[...] = jnp.zeros_like(sum_ref)
        sq_ref[...] = jnp.zeros_like(sq_ref)

    # im2col conv as matmul: bf16 inputs, f32 accumulation on the MXU.
    y = jnp.dot(patches_ref[...], w_ref[...], preferred_element_type=jnp.float32)
    y_ref[...] = y

    # Padded M rows are exactly zero (no conv bias in-kernel), so they contribute
    # nothing to sum / sumsq; dividing by the true M below is exact.
    sum_ref[...] += jnp.sum(y, axis=0, keepdims=True)
    sq_ref[...] += jnp.sum(y * y, axis=0, keepdims=True)

    @pl.when(i == pl.num_programs(0) - 1)
    def _():
        mean = sum_ref[...] * inv_m
        var = jnp.maximum(sq_ref[...] * inv_m - mean * mean, 0.0)
        scale = gamma_ref[...] * jax.lax.rsqrt(var + BN_EPS)
        shift = beta_ref[...] - mean * scale
        ss_ref[...] = jnp.concatenate([scale, shift], axis=0)


def _bn_relu_kernel(y_ref, ss_ref, out_ref):
    """Pass 2: out = relu(y * scale + shift), one FMA + max per element."""
    scale = ss_ref[pl.ds(0, 1), :]
    shift = ss_ref[pl.ds(1, 1), :]
    out_ref[...] = jnp.maximum(y_ref[...] * scale + shift, 0.0).astype(out_ref.dtype)


def _im2col_nhwc(x_nhwc, kh, kw, stride, padding):
    """x_nhwc: (N, H, W, Cin) -> patches (N, Ho, Wo, kh*kw*Cin), order (kh, kw, cin)."""
    n, h, w, cin = x_nhwc.shape
    ho = (h + 2 * padding - kh) // stride + 1
    wo = (w + 2 * padding - kw) // stride + 1
    xp = jnp.pad(x_nhwc, ((0, 0), (padding, padding), (padding, padding), (0, 0)))
    cols = []
    for i in range(kh):
        for j in range(kw):
            cols.append(xp[:, i:i + (ho - 1) * stride + 1:stride,
                           j:j + (wo - 1) * stride + 1:stride, :])
    patches = jnp.concatenate(cols, axis=-1)
    return patches, ho, wo


@functools.partial(jax.jit, static_argnames=("stride", "padding", "block_m"))
def single_conv(x_nchw, weight, bias, gamma, beta, *, stride, padding, block_m=256):
    """Equivalent of SingleConv.forward (Conv2d -> BatchNorm2d train-mode -> ReLU).

    x_nchw : (N, Cin, H, W)       weight: (Cout, Cin, Kh, Kw)
    bias/gamma/beta : (Cout,)     returns (N, Cout, Ho, Wo)
    """
    cout, cin, kh, kw = weight.shape
    n = x_nchw.shape[0]

    # NCHW -> NHWC, then im2col (XLA glue under jit).
    x_nhwc = jnp.transpose(x_nchw, (0, 2, 3, 1))
    patches, ho, wo = _im2col_nhwc(x_nhwc, kh, kw, stride, padding)
    m = n * ho * wo
    k = kh * kw * cin

    # Train-mode BN subtracts the batch mean, so the per-channel conv bias cancels
    # exactly -> drop it (saves a full (M,C) VPU pass and one input stream).
    del bias

    # Tile M (rows) so BlockSpec double-buffering overlaps DMA with MXU/VPU work.
    # block_m=256 keeps 2x double-buffered tiles far under the v7x 64 MiB VMEM;
    # for very large M, 512-1024 row tiles approach HBM roofline.
    tm = min(block_m, _round_up(m, 8))
    m_pad = _round_up(m, tm)
    n_tiles = m_pad // tm
    c_pad = _round_up(cout, LANE)  # lane-dense channel axis (128; 256 fills v6e/v7x MXU)

    # bf16 MXU operands; zero-pad M rows and Cout lanes (padding is inert: zero rows
    # add nothing to the stats, padded channels are sliced off at the end).
    patches2d = jnp.zeros((m_pad, k), jnp.bfloat16).at[:m].set(
        patches.reshape(m, k).astype(jnp.bfloat16))
    # PyTorch (Cout, Cin, Kh, Kw) -> (Kh, Kw, Cin, Cout) -> (K, Cpad) to match patch order.
    w2d = jnp.zeros((k, c_pad), jnp.bfloat16).at[:, :cout].set(
        jnp.transpose(weight, (2, 3, 1, 0)).reshape(k, cout).astype(jnp.bfloat16))
    g2d = jnp.zeros((1, c_pad), jnp.float32).at[:, :cout].set(
        gamma.reshape(1, cout).astype(jnp.float32))
    be2d = jnp.zeros((1, c_pad), jnp.float32).at[:, :cout].set(
        beta.reshape(1, cout).astype(jnp.float32))

    cost1 = pl.CostEstimate(
        flops=2 * m_pad * k * c_pad,
        transcendentals=0,
        bytes_accessed=(patches2d.size * 2 + w2d.size * 2
                        + m_pad * c_pad * 4 + 2 * c_pad * 4),
    )

    # ---- Pass 1: conv matmul + batch statistics (serial reduction over M tiles) ----
    y_conv, scale_shift = pl.pallas_call(
        functools.partial(_conv_stats_kernel, inv_m=1.0 / m),
        out_shape=(
            jax.ShapeDtypeStruct((m_pad, c_pad), jnp.float32),
            jax.ShapeDtypeStruct((2, c_pad), jnp.float32),
        ),
        grid_spec=pltpu.PrefetchScalarGridSpec(
            num_scalar_prefetch=0,
            grid=(n_tiles,),
            in_specs=[
                pl.BlockSpec((tm, k), lambda i: (i, 0)),
                pl.BlockSpec((k, c_pad), lambda i: (0, 0)),
                pl.BlockSpec((1, c_pad), lambda i: (0, 0)),
                pl.BlockSpec((1, c_pad), lambda i: (0, 0)),
            ],
            out_specs=(
                pl.BlockSpec((tm, c_pad), lambda i: (i, 0)),
                pl.BlockSpec((2, c_pad), lambda i: (0, 0)),
            ),
            scratch_shapes=[
                pltpu.VMEM((1, c_pad), jnp.float32),  # running sum
                pltpu.VMEM((1, c_pad), jnp.float32),  # running sum of squares
            ],
        ),
        compiler_params=pltpu.CompilerParams(
            dimension_semantics=("arbitrary",),
            vmem_limit_bytes=VMEM_LIMIT_BYTES),
        cost_estimate=cost1,
    )(patches2d, w2d, g2d, be2d)

    # ---- Pass 2: affine BN + ReLU (parallel over M tiles; both TCs on v7x) ----
    out2d = pl.pallas_call(
        _bn_relu_kernel,
        out_shape=jax.ShapeDtypeStruct((m_pad, c_pad), jnp.float32),
        grid_spec=pltpu.PrefetchScalarGridSpec(
            num_scalar_prefetch=0,
            grid=(n_tiles,),
            in_specs=[
                pl.BlockSpec((tm, c_pad), lambda i: (i, 0)),
                pl.BlockSpec((2, c_pad), lambda i: (0, 0)),
            ],
            out_specs=pl.BlockSpec((tm, c_pad), lambda i: (i, 0)),
        ),
        compiler_params=pltpu.CompilerParams(
            dimension_semantics=("parallel",),
            vmem_limit_bytes=VMEM_LIMIT_BYTES),
    )(y_conv, scale_shift)

    # (Mpad, Cpad) -> slice true M/Cout -> (N, Ho, Wo, Cout) -> NCHW (PyTorch convention).
    out_nhwc = out2d[:m, :cout].reshape(n, ho, wo, cout)
    return jnp.transpose(out_nhwc, (0, 3, 1, 2))


if __name__ == "__main__":
    # SingleConv(in_channels=4, out_channels=8, kernel_size=3, stride=1, padding=1)
    N, CIN, H, W = 2, 4, 16, 16
    COUT, KH, KW = 8, 3, 3
    STRIDE, PADDING = 1, 1

    key = jax.random.PRNGKey(0)
    kx, kw_, kb, kg, kbe = jax.random.split(key, 5)

    x = jax.random.normal(kx, (N, CIN, H, W), dtype=jnp.float32)
    weight = 0.1 * jax.random.normal(kw_, (COUT, CIN, KH, KW), dtype=jnp.float32)
    bias = 0.1 * jax.random.normal(kb, (COUT,), dtype=jnp.float32)
    gamma = 1.0 + 0.1 * jax.random.normal(kg, (COUT,), dtype=jnp.float32)
    beta = 0.1 * jax.random.normal(kbe, (COUT,), dtype=jnp.float32)

    out = single_conv(x, weight, bias, gamma, beta, stride=STRIDE, padding=PADDING)
    jax.block_until_ready(out)

    # Reference: conv (bf16 operands to match the kernel's MXU precision, f32 accum)
    # -> train-mode BatchNorm (biased var) -> ReLU. Bias IS applied here; it cancels.
    ref_conv = jax.lax.conv_general_dilated(
        x.astype(jnp.bfloat16), weight.astype(jnp.bfloat16),
        window_strides=(STRIDE, STRIDE),
        padding=((PADDING, PADDING), (PADDING, PADDING)),
        dimension_numbers=("NCHW", "OIHW", "NCHW"),
        preferred_element_type=jnp.float32,
    ) + bias[None, :, None, None]
    mu = jnp.mean(ref_conv, axis=(0, 2, 3), keepdims=True)
    var = jnp.mean((ref_conv - mu) ** 2, axis=(0, 2, 3), keepdims=True)
    ref = jnp.maximum(
        (ref_conv - mu) * jax.lax.rsqrt(var + BN_EPS)
        * gamma[None, :, None, None] + beta[None, :, None, None], 0.0)

    assert out.shape == (N, COUT, H, W), out.shape
    max_err = float(jnp.max(jnp.abs(out - ref)))
    assert jnp.allclose(out, ref, atol=3e-3, rtol=3e-3), max_err

    print("KERNEL_OK")
</pallas_src>

<mosaic_0001>
module attributes {stable_mosaic.version = 11 : i64} {
  func.func @_conv_stats_kernel(%arg0: i32, %arg1: memref<256x36xbf16, #tpu.memory_space<vmem>>, %arg2: memref<36x128xbf16, #tpu.memory_space<vmem>>, %arg3: memref<1x128xf32, #tpu.memory_space<vmem>>, %arg4: memref<1x128xf32, #tpu.memory_space<vmem>>, %arg5: memref<256x128xf32, #tpu.memory_space<vmem>>, %arg6: memref<2x128xf32, #tpu.memory_space<vmem>>, %arg7: memref<1x128xf32, #tpu.memory_space<vmem>>, %arg8: memref<1x128xf32, #tpu.memory_space<vmem>>) attributes {dimension_semantics = [#tpu.dimension_semantics<arbitrary>], iteration_bounds = array<i64: 2>, scalar_prefetch = 0 : i64, scratch_operands = 2 : i64, tpu.core_type = #tpu.core_type<tc>, window_params = [{transform_indices = @transform_0, window_bounds = array<i64: 256, 36>}, {pipeline_mode = #tpu.pipeline_mode<synchronous>, transform_indices = @transform_1, window_bounds = array<i64: 36, 128>}, {pipeline_mode = #tpu.pipeline_mode<synchronous>, transform_indices = @transform_2, window_bounds = array<i64: 1, 128>}, {pipeline_mode = #tpu.pipeline_mode<synchronous>, transform_indices = @transform_3, window_bounds = array<i64: 1, 128>}, {transform_indices = @transform_4, window_bounds = array<i64: 256, 128>}, {pipeline_mode = #tpu.pipeline_mode<synchronous>, transform_indices = @transform_5, window_bounds = array<i64: 2, 128>}]} {
    %c0_i32 = arith.constant 0 : i32
    %0 = arith.cmpi eq, %arg0, %c0_i32 : i32
    %1 = arith.extui %0 : i1 to i32
    %c0_i32_0 = arith.constant 0 : i32
    %2 = arith.cmpi ne, %1, %c0_i32_0 : i32
    scf.if %2 {
      %cst_17 = arith.constant 0.000000e+00 : f32
      %21 = vector.broadcast %cst_17 : f32 to vector<1x128xf32>
      %c0_18 = arith.constant 0 : index
      %c0_19 = arith.constant 0 : index
      %22 = vector.load %arg7[%c0_18, %c0_19] : memref<1x128xf32, #tpu.memory_space<vmem>>, vector<1x128xf32>
      tpu.vector_store %arg7[%c0_18, %c0_19], %21 {strides = array<i32>} : memref<1x128xf32, #tpu.memory_space<vmem>>, vector<1x128xf32>,
      %cst_20 = arith.constant 0.000000e+00 : f32
      %23 = vector.broadcast %cst_20 : f32 to vector<1x128xf32>
      %c0_21 = arith.constant 0 : index
      %c0_22 = arith.constant 0 : index
      %24 = vector.load %arg8[%c0_21, %c0_22] : memref<1x128xf32, #tpu.memory_space<vmem>>, vector<1x128xf32>
      tpu.vector_store %arg8[%c0_21, %c0_22], %23 {strides = array<i32>} : memref<1x128xf32, #tpu.memory_space<vmem>>, vector<1x128xf32>,
    } else {
    }
    %c0 = arith.constant 0 : index
    %c0_1 = arith.constant 0 : index
    %3 = vector.load %arg1[%c0, %c0_1] : memref<256x36xbf16, #tpu.memory_space<vmem>>, vector<256x36xbf16>
    %c0_2 = arith.constant 0 : index
    %c0_3 = arith.constant 0 : index
    %4 = vector.load %arg2[%c0_2, %c0_3] : memref<36x128xbf16, #tpu.memory_space<vmem>>, vector<36x128xbf16>
    %cst = arith.constant dense<0.000000e+00> : vector<256x128xf32>
    %5 = tpu.matmul %3, %4, %cst {dimension_numbers = #tpu.dot_dimension_numbers<[1], [0], [0], [1], [0, 0, 1, 1], [], []>} : vector<256x36xbf16>, vector<36x128xbf16>, vector<256x128xf32> -> vector<256x128xf32>
    %c0_4 = arith.constant 0 : index
    %c0_5 = arith.constant 0 : index
    %6 = vector.load %arg5[%c0_4, %c0_5] : memref<256x128xf32, #tpu.memory_space<vmem>>, vector<256x128xf32>
    tpu.vector_store %arg5[%c0_4, %c0_5], %5 {strides = array<i32>} : memref<256x128xf32, #tpu.memory_space<vmem>>, vector<256x128xf32>,
    %c0_6 = arith.constant 0 : index
    %c0_7 = arith.constant 0 : index
    %7 = vector.load %arg7[%c0_6, %c0_7] : memref<1x128xf32, #tpu.memory_space<vmem>>, vector<1x128xf32>
    %cst_8 = arith.constant dense<0.000000e+00> : vector<128xf32>
    %8 = vector.multi_reduction <add>, %5, %cst_8 [0] : vector<256x128xf32> to vector<128xf32>
    %9 = vector.shape_cast %8 : vector<128xf32> to vector<1x128xf32>
    %10 = arith.addf %7, %9 : vector<1x128xf32>
    %c0_9 = arith.constant 0 : index
    %c0_10 = arith.constant 0 : index
    %11 = vector.load %arg7[%c0_9, %c0_10] : memref<1x128xf32, #tpu.memory_space<vmem>>, vector<1x128xf32>
    tpu.vector_store %arg7[%c0_9, %c0_10], %10 {strides = array<i32>} : memref<1x128xf32, #tpu.memory_space<vmem>>, vector<1x128xf32>,
    %c0_11 = arith.constant 0 : index
    %c0_12 = arith.constant 0 : index
    %12 = vector.load %arg8[%c0_11, %c0_12] : memref<1x128xf32, #tpu.memory_space<vmem>>, vector<1x128xf32>
    %13 = arith.mulf %5, %5 : vector<256x128xf32>
    %cst_13 = arith.constant dense<0.000000e+00> : vector<128xf32>
    %14 = vector.multi_reduction <add>, %13, %cst_13 [0] : vector<256x128xf32> to vector<128xf32>
    %15 = vector.shape_cast %14 : vector<128xf32> to vector<1x128xf32>
    %16 = arith.addf %12, %15 : vector<1x128xf32>
    %c0_14 = arith.constant 0 : index
    %c0_15 = arith.constant 0 : index
    %17 = vector.load %arg8[%c0_14, %c0_15] : memref<1x128xf32, #tpu.memory_space<vmem>>, vector<1x128xf32>
    tpu.vector_store %arg8[%c0_14, %c0_15], %16 {strides = array<i32>} : memref<1x128xf32, #tpu.memory_space<vmem>>, vector<1x128xf32>,
    %c1_i32 = arith.constant 1 : i32
    %18 = arith.cmpi eq, %arg0, %c1_i32 : i32
    %19 = arith.extui %18 : i1 to i32
    %c0_i32_16 = arith.constant 0 : i32
    %20 = arith.cmpi ne, %19, %c0_i32_16 : i32
    scf.if %20 {
      %c0_17 = arith.constant 0 : index
      %c0_18 = arith.constant 0 : index
      %21 = vector.load %arg7[%c0_17, %c0_18] : memref<1x128xf32, #tpu.memory_space<vmem>>, vector<1x128xf32>
      %cst_19 = arith.constant 0.001953125 : f32
      %22 = vector.broadcast %cst_19 : f32 to vector<1x128xf32>
      %23 = arith.mulf %21, %22 : vector<1x128xf32>
      %c0_20 = arith.constant 0 : index
      %c0_21 = arith.constant 0 : index
      %24 = vector.load %arg8[%c0_20, %c0_21] : memref<1x128xf32, #tpu.memory_space<vmem>>, vector<1x128xf32>
      %cst_22 = arith.constant 0.001953125 : f32
      %25 = vector.broadcast %cst_22 : f32 to vector<1x128xf32>
      %26 = arith.mulf %24, %25 : vector<1x128xf32>
      %27 = arith.mulf %23, %23 : vector<1x128xf32>
      %28 = arith.subf %26, %27 : vector<1x128xf32>
      %cst_23 = arith.constant 0.000000e+00 : f32
      %29 = vector.broadcast %cst_23 : f32 to vector<1x128xf32>
      %30 = arith.maximumf %28, %29 : vector<1x128xf32>
      %c0_24 = arith.constant 0 : index
      %c0_25 = arith.constant 0 : index
      %31 = vector.load %arg3[%c0_24, %c0_25] : memref<1x128xf32, #tpu.memory_space<vmem>>, vector<1x128xf32>
      %cst_26 = arith.constant 9.99999974E-6 : f32
      %32 = vector.broadcast %cst_26 : f32 to vector<1x128xf32>
      %33 = arith.addf %30, %32 : vector<1x128xf32>
      %34 = math.rsqrt %33 : vector<1x128xf32>
      %35 = arith.mulf %31, %34 : vector<1x128xf32>
      %c0_27 = arith.constant 0 : index
      %c0_28 = arith.constant 0 : index
      %36 = vector.load %arg4[%c0_27, %c0_28] : memref<1x128xf32, #tpu.memory_space<vmem>>, vector<1x128xf32>
      %37 = arith.mulf %23, %35 : vector<1x128xf32>
      %38 = arith.subf %36, %37 : vector<1x128xf32>
      %39 = tpu.concatenate %35, %38 in 0 : vector<1x128xf32>, vector<1x128xf32> -> vector<2x128xf32>
      %c0_29 = arith.constant 0 : index
      %c0_30 = arith.constant 0 : index
      %40 = vector.load %arg6[%c0_29, %c0_30] : memref<2x128xf32, #tpu.memory_space<vmem>>, vector<2x128xf32>
      tpu.vector_store %arg6[%c0_29, %c0_30], %39 {strides = array<i32>} : memref<2x128xf32, #tpu.memory_space<vmem>>, vector<2x128xf32>,
    } else {
    }
    return
  }
  func.func @transform_0(%arg0: i32) -> (i32, i32) {
    %c0_i32 = arith.constant 0 : i32
    %c0_i32_0 = arith.constant 0 : i32
    return %arg0, %c0_i32 : i32, i32
  }
  func.func @transform_1(%arg0: i32) -> (i32, i32) {
    %c0_i32 = arith.constant 0 : i32
    %c0_i32_0 = arith.constant 0 : i32
    %c0_i32_1 = arith.constant 0 : i32
    return %c0_i32, %c0_i32_0 : i32, i32
  }
  func.func @transform_2(%arg0: i32) -> (i32, i32) {
    %c0_i32 = arith.constant 0 : i32
    %c0_i32_0 = arith.constant 0 : i32
    %c0_i32_1 = arith.constant 0 : i32
    return %c0_i32, %c0_i32_0 : i32, i32
  }
  func.func @transform_3(%arg0: i32) -> (i32, i32) {
    %c0_i32 = arith.constant 0 : i32
    %c0_i32_0 = arith.constant 0 : i32
    %c0_i32_1 = arith.constant 0 : i32
    return %c0_i32, %c0_i32_0 : i32, i32
  }
  func.func @transform_4(%arg0: i32) -> (i32, i32) {
    %c0_i32 = arith.constant 0 : i32
    %c0_i32_0 = arith.constant 0 : i32
    return %arg0, %c0_i32 : i32, i32
  }
  func.func @transform_5(%arg0: i32) -> (i32, i32) {
    %c0_i32 = arith.constant 0 : i32
    %c0_i32_0 = arith.constant 0 : i32
    %c0_i32_1 = arith.constant 0 : i32
    return %c0_i32, %c0_i32_0 : i32, i32
  }
}

module attributes {stable_mosaic.version = 11 : i64} {
  func.func @_bn_relu_kernel(%arg0: i32, %arg1: memref<256x128xf32, #tpu.memory_space<vmem>>, %arg2: memref<2x128xf32, #tpu.memory_space<vmem>>, %arg3: memref<256x128xf32, #tpu.memory_space<vmem>>) attributes {dimension_semantics = [#tpu.dimension_semantics<parallel>], iteration_bounds = array<i64: 2>, scalar_prefetch = 0 : i64, scratch_operands = 0 : i64, tpu.core_type = #tpu.core_type<tc>, window_params = [{transform_indices = @transform_0, window_bounds = array<i64: 256, 128>}, {pipeline_mode = #tpu.pipeline_mode<synchronous>, transform_indices = @transform_1, window_bounds = array<i64: 2, 128>}, {transform_indices = @transform_2, window_bounds = array<i64: 256, 128>}]} {
    %c0 = arith.constant 0 : index
    %c0_0 = arith.constant 0 : index
    %0 = vector.load %arg2[%c0, %c0_0] : memref<2x128xf32, #tpu.memory_space<vmem>>, vector<1x128xf32>
    %c1 = arith.constant 1 : index
    %c0_1 = arith.constant 0 : index
    %1 = vector.load %arg2[%c1, %c0_1] : memref<2x128xf32, #tpu.memory_space<vmem>>, vector<1x128xf32>
    %c0_2 = arith.constant 0 : index
    %c0_3 = arith.constant 0 : index
    %2 = vector.load %arg1[%c0_2, %c0_3] : memref<256x128xf32, #tpu.memory_space<vmem>>, vector<256x128xf32>
    %3 = vector.broadcast %0 : vector<1x128xf32> to vector<256x128xf32>
    %4 = arith.mulf %2, %3 : vector<256x128xf32>
    %5 = vector.broadcast %1 : vector<1x128xf32> to vector<256x128xf32>
    %6 = arith.addf %4, %5 : vector<256x128xf32>
    %cst = arith.constant 0.000000e+00 : f32
    %7 = vector.broadcast %cst : f32 to vector<256x128xf32>
    %8 = arith.maximumf %6, %7 : vector<256x128xf32>
    %c0_4 = arith.constant 0 : index
    %c0_5 = arith.constant 0 : index
    %9 = vector.load %arg3[%c0_4, %c0_5] : memref<256x128xf32, #tpu.memory_space<vmem>>, vector<256x128xf32>
    tpu.vector_store %arg3[%c0_4, %c0_5], %8 {strides = array<i32>} : memref<256x128xf32, #tpu.memory_space<vmem>>, vector<256x128xf32>,
    return
  }
  func.func @transform_0(%arg0: i32) -> (i32, i32) {
    %c0_i32 = arith.constant 0 : i32
    %c0_i32_0 = arith.constant 0 : i32
    return %arg0, %c0_i32 : i32, i32
  }
  func.func @transform_1(%arg0: i32) -> (i32, i32) {
    %c0_i32 = arith.constant 0 : i32
    %c0_i32_0 = arith.constant 0 : i32
    %c0_i32_1 = arith.constant 0 : i32
    return %c0_i32, %c0_i32_0 : i32, i32
  }
  func.func @transform_2(%arg0: i32) -> (i32, i32) {
    %c0_i32 = arith.constant 0 : i32
    %c0_i32_0 = arith.constant 0 : i32
    return %arg0, %c0_i32 : i32, i32
  }
}

</mosaic_0001>

<llo_original>
// kernel: single_conv.3
$region0: #{single_conv.3}
  #allocation0 [shape = 'u32[]', space=smem, size = 0x4, offset = 0x4, fixed_abs, tag = 'smem constant byte address 0x4 - core index']
  #allocation1 [shape = 'u32[144,128]{1,0:T(1,128)}', space=vmem, size = 0x12000, scoped, tag = 'internal scratch']
  %s0 = inlined_call_operand.vmem [shape: f32[512,128], index: 0, kind: input, shape index: {}]
  %s1 = inlined_call_operand.vmem [shape: f32[2,128], index: 1, kind: input, shape index: {}]
  %s2 = inlined_call_operand.vmem [shape: f32[512,128], index: 2, kind: output, shape index: {}]
  %s3 = sld [smem:[#allocation0]]
  $region41: #{single_conv.3} parent=0
    _
  %s5 = ssub.s32 1, %s3
  %s6 = scalar_select 0, %s5, %s3
  loop: start=0, step=1, limit=4
  $region2: #{single_conv.3} parent=0 // loop_pre_header
    _
  $region3: #{single_conv.3} parent=0 // loop_header
    %s8 = sphi 0, %s12
    %p9 = scmp.ge.s32.totalorder %s8, 4
    %s18 = sphi 0, %s20
    %s21 = sphi 0, %s18
    %s22 = sphi 0, %s21
    %s38 = sphi 0, %s22
    %s42 = sphi 0, %s42
    %s44 = sphi 0, %s42
    %s45 = sphi 0, %s44
    %s59 = sphi 0, %s45
    %s65 = sphi 0, %s67
    %s68 = sphi 0, %s65
    %s69 = sphi 0, %s68
    %s85 = sphi 0, %s69
  $region4: #{single_conv.3} parent=0 // loop_header_branch
    %11 = sbr.rel (%p9) target = $region8
  $region5: #{single_conv.3} parent=0 // loop_body
    %s13 = ssub.s32 %s8, 1
    %s14 = ssub.s32 %s8, 2
    %s15 = sadd.s32 %s8, 1
    %s16 = ssub.s32 %s8, %s15
    %p17 = scmp.eq.s32.totalorder %s16, 0
    %s19 = sadd.s32 %s18, 1
    %s20 = scalar_select %p17, %s18, %s19
    %p23 = pneg %p17
    %p24 = scmp.eq.s32.totalorder %s8, 1
    %p25 = por %p23, %p24
    %p26 = scmp.ne.s32.totalorder %s18, %s21
    %p27 = scmp.eq.s32.totalorder %s8, 0
    %p28 = por %p26, %p27
    %p29 = scmp.ne.s32.totalorder %s18, %s21
    %p30 = scmp.eq.s32.totalorder %s13, 1
    %p31 = por %p29, %p30
    %p32 = scmp.ne.s32.totalorder %s21, %s22
    %p33 = scmp.eq.s32.totalorder %s13, 0
    %p34 = por %p32, %p33
    %p35 = scmp.ne.s32.totalorder %s21, %s22
    %p36 = scmp.eq.s32.totalorder %s14, 1
    %p37 = por %p35, %p36
    %p39 = scmp.ne.s32.totalorder %s22, %s38
    %p40 = scmp.eq.s32.totalorder %s14, 0
    %p41 = por %p39, %p40
    %s43 = sadd.s32 %s42, 1
    %p46 = scmp.eq.s32.totalorder %s8, 1
    %p47 = scmp.ne.s32.totalorder %s42, %s44
    %p48 = scmp.eq.s32.totalorder %s8, 0
    %p49 = por %p47, %p48
    %p50 = scmp.ne.s32.totalorder %s42, %s44
    %p51 = scmp.eq.s32.totalorder %s13, 1
    %p52 = por %p50, %p51
    %p53 = scmp.ne.s32.totalorder %s44, %s45
    %p54 = scmp.eq.s32.totalorder %s13, 0
    %p55 = por %p53, %p54
    %p56 = scmp.ne.s32.totalorder %s44, %s45
    %p57 = scmp.eq.s32.totalorder %s14, 1
    %p58 = por %p56, %p57
    %p60 = scmp.ne.s32.totalorder %s45, %s59
    %p61 = scmp.eq.s32.totalorder %s14, 0
    %p62 = por %p60, %p61
    %s63 = ssub.s32 %s8, %s15
    %p64 = scmp.eq.s32.totalorder %s63, 0
    %s66 = sadd.s32 %s65, 1
    %s67 = scalar_select %p64, %s65, %s66
    %p70 = pneg %p64
    %p71 = scmp.eq.s32.totalorder %s8, 1
    %p72 = por %p70, %p71
    %p73 = scmp.ne.s32.totalorder %s65, %s68
    %p74 = scmp.eq.s32.totalorder %s8, 0
    %p75 = por %p73, %p74
    %p76 = scmp.ne.s32.totalorder %s65, %s68
    %p77 = scmp.eq.s32.totalorder %s13, 1
    %p78 = por %p76, %p77
    %p79 = scmp.ne.s32.totalorder %s68, %s69
    %p80 = scmp.eq.s32.totalorder %s13, 0
    %p81 = por %p79, %p80
    %p82 = scmp.ne.s32.totalorder %s68, %s69
    %p83 = scmp.eq.s32.totalorder %s14, 1
    %p84 = por %p82, %p83
    %p86 = scmp.ne.s32.totalorder %s69, %s85
    %p87 = scmp.eq.s32.totalorder %s14, 0
    %p88 = por %p86, %p87
    %p89 = scmp.le.s32.totalorder 1, %s8
    %p90 = scmp.lt.s32.totalorder %s8, 3
    %p91 = pnand %p89, %p90
    %p92 = pneg %p91
    // Predicated region
    $region9: #{single_conv.3} parent=5 // pred_check
      _
    $region10: #{single_conv.3} parent=5 // pred_check_branch
      %94 = sbr.rel (%p91) target = $region12
    $region11: #{single_conv.3} parent=5 // pred_region
      %s95 = ssub.s32 %s8, 1
      // Predicated region
      $region13: #{single_conv.3} parent=11 // pred_check
        %p96 = pneg %p55
      $region14: #{single_conv.3} parent=11 // pred_check_branch
        %98 = sbr.rel (%p96) target = $region16
      $region15: #{single_conv.3} parent=11 // pred_region
        _
      $region16: #{single_conv.3} parent=11 // pred_fallthru
        _
    $region12: #{single_conv.3} parent=5 // pred_fallthru
      _
    %p99 = scmp.lt.s32.totalorder %s8, 2
    // Predicated region
    $region17: #{single_conv.3} parent=5 // pred_check
      %p100 = pneg %p99
    $region18: #{single_conv.3} parent=5 // pred_check_branch
      %102 = sbr.rel (%p100) target = $region20
    $region19: #{single_conv.3} parent=5 // pred_region
      // Predicated region
      $region21: #{single_conv.3} parent=19 // pred_check
        %p103 = pneg %p28
      $region22: #{single_conv.3} parent=19 // pred_check_branch
        %105 = sbr.rel (%p103) target = $region24
      $region23: #{single_conv.3} parent=19 // pred_region
        %s106 = smul.u32 32, %s8
        %p107 = scmp.lt.s32.totalorder %s106, 63
        %s108 = scalar_select %p107, %s106, 63
        %s109 = smul.addr %s108, 8
        %s110 = scalar_lea.vmem %s0, %s109
        %s111 = smul.u32 32, %s8
      $region24: #{single_conv.3} parent=19 // pred_fallthru
        _
    $region20: #{single_conv.3} parent=5 // pred_fallthru
      _
    %p112 = scmp.le.s32.totalorder 1, %s8
    %p113 = scmp.lt.s32.totalorder %s8, 3
    %p114 = pnand %p112, %p113
    %p115 = pneg %p114
    // Predicated region
    $region25: #{single_conv.3} parent=5 // pred_check
      _
    $region26: #{single_conv.3} parent=5 // pred_check_branch
      %117 = sbr.rel (%p114) target = $region28
    $region27: #{single_conv.3} parent=5 // pred_region
      %s118 = ssub.s32 %s8, 1
      %s119 = smul.u32 32, %s13
      %p120 = scmp.lt.s32.totalorder %s119, 63
      %s121 = scalar_select %p120, %s119, 63
      %s122 = smul.addr %s121, 8
      %s123 = scalar_lea.vmem %s0, %s122
      %p124 = pneg %p34
      %p125 = pneg %p31
      %p126 = pneg %p55
      %p127 = pneg %p52
      %p128 = pneg %p81
      %p129 = pneg %p78
      %s130 = smul.u32 32, %s13
      %p131 = scmp.lt.s32.totalorder %s130, 63
      %s132 = scalar_select %p131, %s130, 63
      %s133 = smul.addr %s132, 8
      %s134 = scalar_lea.vmem %s2, %s133
      %s135 = smul.u32 32, %s13
      %p136 = scmp.lt.s32.totalorder %s135, 63
      %s137 = scalar_select %p136, %s135, 63
      %s138 = smul.addr %s137, 8
      %s139 = scalar_lea.vmem %s0, %s138
      %s140 = smul.u32 32, %s13
      %s141 = smul.u32 32, %s13
      %p142 = scmp.lt.s32.totalorder %s141, 63
      %s143 = scalar_select %p142, %s141, 63
      %s144 = smul.addr %s143, 8
      %s145 = scalar_lea.vmem %s2, %s144
      %s146 = smul.u32 32, %s13
      %v147 = vld [vmem:[%s1] sm:$0x1]
      %v148 = vld [vmem:[%s1 + $0x1] sm:$0x1]
      %v149 = vld [vmem:[%s139] sm:$0xff]
      %v150 = vld [vmem:[%s139 + $0x8] sm:$0xff]
      %v151 = vld [vmem:[%s139 + $0x10] sm:$0xff]
      %v152 = vld [vmem:[%s139 + $0x18] sm:$0xff]
      %v153 = vld [vmem:[%s139 + $0x20] sm:$0xff]
      %v154 = vld [vmem:[%s139 + $0x28] sm:$0xff]
      %v155 = vld [vmem:[%s139 + $0x30] sm:$0xff]
      %v156 = vld [vmem:[%s139 + $0x38] sm:$0xff]
      %v157 = vld [vmem:[%s139 + $0x40] sm:$0xff]
      %v158 = vld [vmem:[%s139 + $0x48] sm:$0xff]
      %v159 = vld [vmem:[%s139 + $0x50] sm:$0xff]
      %v160 = vld [vmem:[%s139 + $0x58] sm:$0xff]
      %v161 = vld [vmem:[%s139 + $0x60] sm:$0xff]
      %v162 = vld [vmem:[%s139 + $0x68] sm:$0xff]
      %v163 = vld [vmem:[%s139 + $0x70] sm:$0xff]
      %v164 = vld [vmem:[%s139 + $0x78] sm:$0xff]
      %v165 = vld [vmem:[%s139 + $0x80] sm:$0xff]
      %v166 = vld [vmem:[%s139 + $0x88] sm:$0xff]
      %v167 = vld [vmem:[%s139 + $0x90] sm:$0xff]
      %v168 = vld [vmem:[%s139 + $0x98] sm:$0xff]
      %v169 = vld [vmem:[%s139 + $0xa0] sm:$0xff]
      %v170 = vld [vmem:[%s139 + $0xa8] sm:$0xff]
      %v171 = vld [vmem:[%s139 + $0xb0] sm:$0xff]
      %v172 = vld [vmem:[%s139 + $0xb8] sm:$0xff]
      %v173 = vld [vmem:[%s139 + $0xc0] sm:$0xff]
      %v174 = vld [vmem:[%s139 + $0xc8] sm:$0xff]
      %v175 = vld [vmem:[%s139 + $0xd0] sm:$0xff]
      %v176 = vld [vmem:[%s139 + $0xd8] sm:$0xff]
      %v177 = vld [vmem:[%s139 + $0xe0] sm:$0xff]
      %v178 = vld [vmem:[%s139 + $0xe8] sm:$0xff]
      %v179 = vld [vmem:[%s139 + $0xf0] sm:$0xff]
      %v180 = vld [vmem:[%s139 + $0xf8] sm:$0xff]
      %v181 = vlaneseq
      %v182 = vshrl.u32 %v181, 7
      %v183 = vsub.s32 0, %v182
      %v184 = vrot.slane %v147, %v183
      %v185 = vmul.f32 %v149, %v184
      %v186 = vmul.f32 %v150, %v184
      %v187 = vmul.f32 %v151, %v184
      %v188 = vmul.f32 %v152, %v184
      %v189 = vmul.f32 %v153, %v184
      %v190 = vmul.f32 %v154, %v184
      %v191 = vmul.f32 %v155, %v184
      %v192 = vmul.f32 %v156, %v184
      %v193 = vmul.f32 %v157, %v184
      %v194 = vmul.f32 %v158, %v184
      %v195 = vmul.f32 %v159, %v184
      %v196 = vmul.f32 %v160, %v184
      %v197 = vmul.f32 %v161, %v184
      %v198 = vmul.f32 %v162, %v184
      %v199 = vmul.f32 %v163, %v184
      %v200 = vmul.f32 %v164, %v184
      %v201 = vmul.f32 %v165, %v184
      %v202 = vmul.f32 %v166, %v184
      %v203 = vmul.f32 %v167, %v184
      %v204 = vmul.f32 %v168, %v184
      %v205 = vmul.f32 %v169, %v184
      %v206 = vmul.f32 %v170, %v184
      %v207 = vmul.f32 %v171, %v184
      %v208 = vmul.f32 %v172, %v184
      %v209 = vmul.f32 %v173, %v184
      %v210 = vmul.f32 %v174, %v184
      %v211 = vmul.f32 %v175, %v184
      %v212 = vmul.f32 %v176, %v184
      %v213 = vmul.f32 %v177, %v184
      %v214 = vmul.f32 %v178, %v184
      %v215 = vmul.f32 %v179, %v184
      %v216 = vmul.f32 %v180, %v184
      %v217 = vlaneseq
      %v218 = vshrl.u32 %v217, 7
      %v219 = vsub.s32 0, %v218
      %v220 = vrot.slane %v148, %v219
      %v221 = vadd.f32 %v185, %v220
      %v222 = vadd.f32 %v186, %v220
      %v223 = vadd.f32 %v187, %v220
      %v224 = vadd.f32 %v188, %v220
      %v225 = vadd.f32 %v189, %v220
      %v226 = vadd.f32 %v190, %v220
      %v227 = vadd.f32 %v191, %v220
      %v228 = vadd.f32 %v192, %v220
      %v229 = vadd.f32 %v193, %v220
      %v230 = vadd.f32 %v194, %v220
      %v231 = vadd.f32 %v195, %v220
      %v232 = vadd.f32 %v196, %v220
      %v233 = vadd.f32 %v197, %v220
      %v234 = vadd.f32 %v198, %v220
      %v235 = vadd.f32 %v199, %v220
      %v236 = vadd.f32 %v200, %v220
      %v237 = vadd.f32 %v201, %v220
      %v238 = vadd.f32 %v202, %v220
      %v239 = vadd.f32 %v203, %v220
      %v240 = vadd.f32 %v204, %v220
      %v241 = vadd.f32 %v205, %v220
      %v242 = vadd.f32 %v206, %v220
      %v243 = vadd.f32 %v207, %v220
      %v244 = vadd.f32 %v208, %v220
      %v245 = vadd.f32 %v209, %v220
      %v246 = vadd.f32 %v210, %v220
      %v247 = vadd.f32 %v211, %v220
      %v248 = vadd.f32 %v212, %v220
      %v249 = vadd.f32 %v213, %v220
      %v250 = vadd.f32 %v214, %v220
      %v251 = vadd.f32 %v215, %v220
      %v252 = vadd.f32 %v216, %v220
      %v253 = vmax.f32 %v221, 0.0
      %v254 = vmax.f32 %v222, 0.0
      %v255 = vmax.f32 %v223, 0.0
      %v256 = vmax.f32 %v224, 0.0
      %v257 = vmax.f32 %v225, 0.0
      %v258 = vmax.f32 %v226, 0.0
      %v259 = vmax.f32 %v227, 0.0
      %v260 = vmax.f32 %v228, 0.0
      %v261 = vmax.f32 %v229, 0.0
      %v262 = vmax.f32 %v230, 0.0
      %v263 = vmax.f32 %v231, 0.0
      %v264 = vmax.f32 %v232, 0.0
      %v265 = vmax.f32 %v233, 0.0
      %v266 = vmax.f32 %v234, 0.0
      %v267 = vmax.f32 %v235, 0.0
      %v268 = vmax.f32 %v236, 0.0
      %v269 = vmax.f32 %v237, 0.0
      %v270 = vmax.f32 %v238, 0.0
      %v271 = vmax.f32 %v239, 0.0
      %v272 = vmax.f32 %v240, 0.0
      %v273 = vmax.f32 %v241, 0.0
      %v274 = vmax.f32 %v242, 0.0
      %v275 = vmax.f32 %v243, 0.0
      %v276 = vmax.f32 %v244, 0.0
      %v277 = vmax.f32 %v245, 0.0
      %v278 = vmax.f32 %v246, 0.0
      %v279 = vmax.f32 %v247, 0.0
      %v280 = vmax.f32 %v248, 0.0
      %v281 = vmax.f32 %v249, 0.0
      %v282 = vmax.f32 %v250, 0.0
      %v283 = vmax.f32 %v251, 0.0
      %v284 = vmax.f32 %v252, 0.0
      %285 = vst [vmem:[%s145] sm:$0xff] %v253
      %286 = vst [vmem:[%s145 + $0x8] sm:$0xff] %v254
      %287 = vst [vmem:[%s145 + $0x10] sm:$0xff] %v255
      %288 = vst [vmem:[%s145 + $0x18] sm:$0xff] %v256
      %289 = vst [vmem:[%s145 + $0x20] sm:$0xff] %v257
      %290 = vst [vmem:[%s145 + $0x28] sm:$0xff] %v258
      %291 = vst [vmem:[%s145 + $0x30] sm:$0xff] %v259
      %292 = vst [vmem:[%s145 + $0x38] sm:$0xff] %v260
      %293 = vst [vmem:[%s145 + $0x40] sm:$0xff] %v261
      %294 = vst [vmem:[%s145 + $0x48] sm:$0xff] %v262
      %295 = vst [vmem:[%s145 + $0x50] sm:$0xff] %v263
      %296 = vst [vmem:[%s145 + $0x58] sm:$0xff] %v264
      %297 = vst [vmem:[%s145 + $0x60] sm:$0xff] %v265
      %298 = vst [vmem:[%s145 + $0x68] sm:$0xff] %v266
      %299 = vst [vmem:[%s145 + $0x70] sm:$0xff] %v267
      %300 = vst [vmem:[%s145 + $0x78] sm:$0xff] %v268
      %301 = vst [vmem:[%s145 + $0x80] sm:$0xff] %v269
      %302 = vst [vmem:[%s145 + $0x88] sm:$0xff] %v270
      %303 = vst [vmem:[%s145 + $0x90] sm:$0xff] %v271
      %304 = vst [vmem:[%s145 + $0x98] sm:$0xff] %v272
      %305 = vst [vmem:[%s145 + $0xa0] sm:$0xff] %v273
      %306 = vst [vmem:[%s145 + $0xa8] sm:$0xff] %v274
      %307 = vst [vmem:[%s145 + $0xb0] sm:$0xff] %v275
      %308 = vst [vmem:[%s145 + $0xb8] sm:$0xff] %v276
      %309 = vst [vmem:[%s145 + $0xc0] sm:$0xff] %v277
      %310 = vst [vmem:[%s145 + $0xc8] sm:$0xff] %v278
      %311 = vst [vmem:[%s145 + $0xd0] sm:$0xff] %v279
      %312 = vst [vmem:[%s145 + $0xd8] sm:$0xff] %v280
      %313 = vst [vmem:[%s145 + $0xe0] sm:$0xff] %v281
      %314 = vst [vmem:[%s145 + $0xe8] sm:$0xff] %v282
      %315 = vst [vmem:[%s145 + $0xf0] sm:$0xff] %v283
      %316 = vst [vmem:[%s145 + $0xf8] sm:$0xff] %v284
      %s317 = smul.u32 32, %s13
      %p318 = scmp.lt.s32.totalorder %s317, 63
      %s319 = scalar_select %p318, %s317, 63
      %s320 = smul.addr %s319, 8
      %s321 = scalar_lea.vmem %s2, %s320
      // Predicated region
      $region29: #{single_conv.3} parent=27 // pred_check
        %p322 = pneg %p78
      $region30: #{single_conv.3} parent=27 // pred_check_branch
        %324 = sbr.rel (%p322) target = $region32
      $region31: #{single_conv.3} parent=27 // pred_region
        %s325 = smul.u32 32, %s13
      $region32: #{single_conv.3} parent=27 // pred_fallthru
        _
    $region28: #{single_conv.3} parent=5 // pred_fallthru
      _
    %p326 = scmp.le.s32.totalorder 2, %s8
    // Predicated region
    $region33: #{single_conv.3} parent=5 // pred_check
      %p327 = pneg %p326
    $region34: #{single_conv.3} parent=5 // pred_check_branch
      %329 = sbr.rel (%p327) target = $region36
    $region35: #{single_conv.3} parent=5 // pred_region
      %s330 = ssub.s32 %s8, 2
      // Predicated region
      $region37: #{single_conv.3} parent=35 // pred_check
        %p331 = pneg %p84
      $region38: #{single_conv.3} parent=35 // pred_check_branch
        %333 = sbr.rel (%p331) target = $region40
      $region39: #{single_conv.3} parent=35 // pred_region
        %s334 = smul.u32 32, %s14
        %p335 = scmp.lt.s32.totalorder %s334, 63
        %s336 = scalar_select %p335, %s334, 63
        %s337 = smul.addr %s336, 8
        %s338 = scalar_lea.vmem %s2, %s337
      $region40: #{single_conv.3} parent=35 // pred_fallthru
        _
    $region36: #{single_conv.3} parent=5 // pred_fallthru
      _
  $region6: #{single_conv.3} parent=0 // loop_footer
    %s12 = sadd.s32 1, %s8
  $region7: #{single_conv.3} parent=0 // loop_footer_branch
    %7 = sbr.rel target = $region3
  $region8: #{single_conv.3} parent=0 // loop_exit
    _

// kernel: single_conv.2
$region0: #{single_conv.2}
  #allocation0 [shape = 'u32[]', space=smem, size = 0x4, offset = 0x4, fixed_abs, tag = 'smem constant byte address 0x4 - core index']
  #allocation1 [shape = 'u32[144,128]{1,0:T(1,128)}', space=vmem, size = 0x12000, scoped, tag = 'internal scratch']
  #allocation2 [shape = 'f32[1,128]{1,0:T(1,128)}', space=vmem, size = 0x200, scoped, tag = 'scratch operand']
  #allocation3 [shape = 'f32[1,128]{1,0:T(1,128)}', space=vmem, size = 0x200, scoped, tag = 'scratch operand']
  %s0 = inlined_call_operand.vmem [shape: bf16[512,36], index: 0, kind: input, shape index: {}]
  %s1 = inlined_call_operand.vmem [shape: bf16[36,128], index: 1, kind: input, shape index: {}]
  %s2 = inlined_call_operand.vmem [shape: f32[1,128], index: 2, kind: input, shape index: {}]
  %s3 = inlined_call_operand.vmem [shape: f32[1,128], index: 3, kind: input, shape index: {}]
  %s4 = inlined_call_operand.vmem [shape: f32[512,128], index: 4, kind: output, shape index: {0}]
  %s5 = inlined_call_operand.vmem [shape: f32[2,128], index: 5, kind: output, shape index: {1}]
  %6 = xla_tuple %s4, %s5
  %s7 = sld [smem:[#allocation0]]
  $region65: #{single_conv.2} parent=0
    _
  %s9 = ssub.s32 1, %s7
  %s10 = scalar_select 0, %s9, %s7
  loop: start=0, step=1, limit=4
  $region2: #{single_conv.2} parent=0 // loop_pre_header
    _
  $region3: #{single_conv.2} parent=0 // loop_header
    %s12 = sphi 0, %s16
    %p13 = scmp.ge.s32.totalorder %s12, 4
    %s22 = sphi 0, %s24
    %s25 = sphi 0, %s22
    %s26 = sphi 0, %s25
    %s42 = sphi 0, %s26
    %s46 = sphi 0, %s46
    %s48 = sphi 0, %s46
    %s49 = sphi 0, %s48
    %s63 = sphi 0, %s49
    %s67 = sphi 0, %s67
    %s69 = sphi 0, %s67
    %s70 = sphi 0, %s69
    %s84 = sphi 0, %s70
    %s88 = sphi 0, %s88
    %s90 = sphi 0, %s88
    %s91 = sphi 0, %s90
    %s105 = sphi 0, %s91
    %s111 = sphi 0, %s113
    %s114 = sphi 0, %s111
    %s115 = sphi 0, %s114
    %s131 = sphi 0, %s115
    %s135 = sphi 0, %s135
    %s137 = sphi 0, %s135
    %s138 = sphi 0, %s137
    %s152 = sphi 0, %s138
  $region4: #{single_conv.2} parent=0 // loop_header_branch
    %15 = sbr.rel (%p13) target = $region8
  $region5: #{single_conv.2} parent=0 // loop_body
    %s17 = ssub.s32 %s12, 1
    %s18 = ssub.s32 %s12, 2
    %s19 = sadd.s32 %s12, 1
    %s20 = ssub.s32 %s12, %s19
    %p21 = scmp.eq.s32.totalorder %s20, 0
    %s23 = sadd.s32 %s22, 1
    %s24 = scalar_select %p21, %s22, %s23
    %p27 = pneg %p21
    %p28 = scmp.eq.s32.totalorder %s12, 1
    %p29 = por %p27, %p28
    %p30 = scmp.ne.s32.totalorder %s22, %s25
    %p31 = scmp.eq.s32.totalorder %s12, 0
    %p32 = por %p30, %p31
    %p33 = scmp.ne.s32.totalorder %s22, %s25
    %p34 = scmp.eq.s32.totalorder %s17, 1
    %p35 = por %p33, %p34
    %p36 = scmp.ne.s32.totalorder %s25, %s26
    %p37 = scmp.eq.s32.totalorder %s17, 0
    %p38 = por %p36, %p37
    %p39 = scmp.ne.s32.totalorder %s25, %s26
    %p40 = scmp.eq.s32.totalorder %s18, 1
    %p41 = por %p39, %p40
    %p43 = scmp.ne.s32.totalorder %s26, %s42
    %p44 = scmp.eq.s32.totalorder %s18, 0
    %p45 = por %p43, %p44
    %s47 = sadd.s32 %s46, 1
    %p50 = scmp.eq.s32.totalorder %s12, 1
    %p51 = scmp.ne.s32.totalorder %s46, %s48
    %p52 = scmp.eq.s32.totalorder %s12, 0
    %p53 = por %p51, %p52
    %p54 = scmp.ne.s32.totalorder %s46, %s48
    %p55 = scmp.eq.s32.totalorder %s17, 1
    %p56 = por %p54, %p55
    %p57 = scmp.ne.s32.totalorder %s48, %s49
    %p58 = scmp.eq.s32.totalorder %s17, 0
    %p59 = por %p57, %p58
    %p60 = scmp.ne.s32.totalorder %s48, %s49
    %p61 = scmp.eq.s32.totalorder %s18, 1
    %p62 = por %p60, %p61
    %p64 = scmp.ne.s32.totalorder %s49, %s63
    %p65 = scmp.eq.s32.totalorder %s18, 0
    %p66 = por %p64, %p65
    %s68 = sadd.s32 %s67, 1
    %p71 = scmp.eq.s32.totalorder %s12, 1
    %p72 = scmp.ne.s32.totalorder %s67, %s69
    %p73 = scmp.eq.s32.totalorder %s12, 0
    %p74 = por %p72, %p73
    %p75 = scmp.ne.s32.totalorder %s67, %s69
    %p76 = scmp.eq.s32.totalorder %s17, 1
    %p77 = por %p75, %p76
    %p78 = scmp.ne.s32.totalorder %s69, %s70
    %p79 = scmp.eq.s32.totalorder %s17, 0
    %p80 = por %p78, %p79
    %p81 = scmp.ne.s32.totalorder %s69, %s70
    %p82 = scmp.eq.s32.totalorder %s18, 1
    %p83 = por %p81, %p82
    %p85 = scmp.ne.s32.totalorder %s70, %s84
    %p86 = scmp.eq.s32.totalorder %s18, 0
    %p87 = por %p85, %p86
    %s89 = sadd.s32 %s88, 1
    %p92 = scmp.eq.s32.totalorder %s12, 1
    %p93 = scmp.ne.s32.totalorder %s88, %s90
    %p94 = scmp.eq.s32.totalorder %s12, 0
    %p95 = por %p93, %p94
    %p96 = scmp.ne.s32.totalorder %s88, %s90
    %p97 = scmp.eq.s32.totalorder %s17, 1
    %p98 = por %p96, %p97
    %p99 = scmp.ne.s32.totalorder %s90, %s91
    %p100 = scmp.eq.s32.totalorder %s17, 0
    %p101 = por %p99, %p100
    %p102 = scmp.ne.s32.totalorder %s90, %s91
    %p103 = scmp.eq.s32.totalorder %s18, 1
    %p104 = por %p102, %p103
    %p106 = scmp.ne.s32.totalorder %s91, %s105
    %p107 = scmp.eq.s32.totalorder %s18, 0
    %p108 = por %p106, %p107
    %s109 = ssub.s32 %s12, %s19
    %p110 = scmp.eq.s32.totalorder %s109, 0
    %s112 = sadd.s32 %s111, 1
    %s113 = scalar_select %p110, %s111, %s112
    %p116 = pneg %p110
    %p117 = scmp.eq.s32.totalorder %s12, 1
    %p118 = por %p116, %p117
    %p119 = scmp.ne.s32.totalorder %s111, %s114
    %p120 = scmp.eq.s32.totalorder %s12, 0
    %p121 = por %p119, %p120
    %p122 = scmp.ne.s32.totalorder %s111, %s114
    %p123 = scmp.eq.s32.totalorder %s17, 1
    %p124 = por %p122, %p123
    %p125 = scmp.ne.s32.totalorder %s114, %s115
    %p126 = scmp.eq.s32.totalorder %s17, 0
    %p127 = por %p125, %p126
    %p128 = scmp.ne.s32.totalorder %s114, %s115
    %p129 = scmp.eq.s32.totalorder %s18, 1
    %p130 = por %p128, %p129
    %p132 = scmp.ne.s32.totalorder %s115, %s131
    %p133 = scmp.eq.s32.totalorder %s18, 0
    %p134 = por %p132, %p133
    %s136 = sadd.s32 %s135, 1
    %p139 = scmp.eq.s32.totalorder %s12, 1
    %p140 = scmp.ne.s32.totalorder %s135, %s137
    %p141 = scmp.eq.s32.totalorder %s12, 0
    %p142 = por %p140, %p141
    %p143 = scmp.ne.s32.totalorder %s135, %s137
    %p144 = scmp.eq.s32.totalorder %s17, 1
    %p145 = por %p143, %p144
    %p146 = scmp.ne.s32.totalorder %s137, %s138
    %p147 = scmp.eq.s32.totalorder %s17, 0
    %p148 = por %p146, %p147
    %p149 = scmp.ne.s32.totalorder %s137, %s138
    %p150 = scmp.eq.s32.totalorder %s18, 1
    %p151 = por %p149, %p150
    %p153 = scmp.ne.s32.totalorder %s138, %s152
    %p154 = scmp.eq.s32.totalorder %s18, 0
    %p155 = por %p153, %p154
    %p156 = scmp.le.s32.totalorder 1, %s12
    %p157 = scmp.lt.s32.totalorder %s12, 3
    %p158 = pnand %p156, %p157
    %p159 = pneg %p158
    // Predicated region
    $region9: #{single_conv.2} parent=5 // pred_check
      _
    $region10: #{single_conv.2} parent=5 // pred_check_branch
      %161 = sbr.rel (%p158) target = $region12
    $region11: #{single_conv.2} parent=5 // pred_region
      %s162 = ssub.s32 %s12, 1
      // Predicated region
      $region13: #{single_conv.2} parent=11 // pred_check
        %p163 = pneg %p59
      $region14: #{single_conv.2} parent=11 // pred_check_branch
        %165 = sbr.rel (%p163) target = $region16
      $region15: #{single_conv.2} parent=11 // pred_region
        _
      $region16: #{single_conv.2} parent=11 // pred_fallthru
        _
      // Predicated region
      $region17: #{single_conv.2} parent=11 // pred_check
        %p166 = pneg %p80
      $region18: #{single_conv.2} parent=11 // pred_check_branch
        %168 = sbr.rel (%p166) target = $region20
      $region19: #{single_conv.2} parent=11 // pred_region
        _
      $region20: #{single_conv.2} parent=11 // pred_fallthru
        _
      // Predicated region
      $region21: #{single_conv.2} parent=11 // pred_check
        %p169 = pneg %p101
      $region22: #{single_conv.2} parent=11 // pred_check_branch
        %171 = sbr.rel (%p169) target = $region24
      $region23: #{single_conv.2} parent=11 // pred_region
        _
      $region24: #{single_conv.2} parent=11 // pred_fallthru
        _
    $region12: #{single_conv.2} parent=5 // pred_fallthru
      _
    %p172 = scmp.lt.s32.totalorder %s12, 2
    // Predicated region
    $region25: #{single_conv.2} parent=5 // pred_check
      %p173 = pneg %p172
    $region26: #{single_conv.2} parent=5 // pred_check_branch
      %175 = sbr.rel (%p173) target = $region28
    $region27: #{single_conv.2} parent=5 // pred_region
      // Predicated region
      $region29: #{single_conv.2} parent=27 // pred_check
        %p176 = pneg %p32
      $region30: #{single_conv.2} parent=27 // pred_check_branch
        %178 = sbr.rel (%p176) target = $region32
      $region31: #{single_conv.2} parent=27 // pred_region
        %s179 = smul.u32 32, %s12
        %p180 = scmp.lt.s32.totalorder %s179, 63
        %s181 = scalar_select %p180, %s179, 63
        %s182 = smul.addr %s181, 4
        %s183 = scalar_lea.vmem %s0, %s182
        %s184 = smul.u32 32, %s12
      $region32: #{single_conv.2} parent=27 // pred_fallthru
        _
    $region28: #{single_conv.2} parent=5 // pred_fallthru
      _
    %p185 = scmp.le.s32.totalorder 1, %s12
    %p186 = scmp.lt.s32.totalorder %s12, 3
    %p187 = pnand %p185, %p186
    %p188 = pneg %p187
    // Predicated region
    $region33: #{single_conv.2} parent=5 // pred_check
      _
    $region34: #{single_conv.2} parent=5 // pred_check_branch
      %190 = sbr.rel (%p187) target = $region36
    $region35: #{single_conv.2} parent=5 // pred_region
      %s191 = ssub.s32 %s12, 1
      %s192 = smul.u32 32, %s17
      %p193 = scmp.lt.s32.totalorder %s192, 63
      %s194 = scalar_select %p193, %s192, 63
      %s195 = smul.addr %s194, 4
      %s196 = scalar_lea.vmem %s0, %s195
      %p197 = pneg %p38
      %p198 = pneg %p35
      %p199 = pneg %p59
      %p200 = pneg %p56
      %p201 = pneg %p80
      %p202 = pneg %p77
      %p203 = pneg %p101
      %p204 = pneg %p98
      %p205 = pneg %p127
      %p206 = pneg %p124
      %s207 = smul.u32 32, %s17
      %p208 = scmp.lt.s32.totalorder %s207, 63
      %s209 = scalar_select %p208, %s207, 63
      %s210 = smul.addr %s209, 8
      %s211 = scalar_lea.vmem %s4, %s210
      %p212 = pneg %p148
      %p213 = pneg %p145
      %s214 = smul.u32 32, %s17
      %p215 = scmp.lt.s32.totalorder %s214, 63
      %s216 = scalar_select %p215, %s214, 63
      %s217 = smul.addr %s216, 4
      %s218 = scalar_lea.vmem %s0, %s217
      %s219 = smul.u32 32, %s17
      %s220 = smul.u32 32, %s17
      %p221 = scmp.lt.s32.totalorder %s220, 63
      %s222 = scalar_select %p221, %s220, 63
      %s223 = smul.addr %s222, 8
      %s224 = scalar_lea.vmem %s4, %s223
      %s225 = smul.u32 32, %s17
      %p227 = scmp.eq.s32.totalorder %s17, 0
      // Predicated region
      $region37: #{single_conv.2} parent=35 // pred_check
        %p228 = pneg %p227
      $region38: #{single_conv.2} parent=35 // pred_check_branch
        %230 = sbr.rel (%p228) target = $region40
      $region39: #{single_conv.2} parent=35 // pred_region
        %231 = vst [vmem:[#allocation2] sm:$0x1] 0.0
        %232 = vst [vmem:[#allocation3] sm:$0x1] 0.0
      $region40: #{single_conv.2} parent=35 // pred_fallthru
        _
      %v233 = vld [vmem:[%s218] sm:$0xf]
      %v234 = vld [vmem:[%s218 + $0x4] sm:$0xf]
      %v235 = vld [vmem:[%s218 + $0x8] sm:$0xf]
      %v236 = vld [vmem:[%s218 + $0xc] sm:$0xf]
      %v237 = vld [vmem:[%s218 + $0x10] sm:$0xf]
      %v238 = vld [vmem:[%s218 + $0x14] sm:$0xf]
      %v239 = vld [vmem:[%s218 + $0x18] sm:$0xf]
      %v240 = vld [vmem:[%s218 + $0x1c] sm:$0xf]
      %v241 = vld [vmem:[%s218 + $0x20] sm:$0xf]
      %v242 = vld [vmem:[%s218 + $0x24] sm:$0xf]
      %v243 = vld [vmem:[%s218 + $0x28] sm:$0xf]
      %v244 = vld [vmem:[%s218 + $0x2c] sm:$0xf]
      %v245 = vld [vmem:[%s218 + $0x30] sm:$0xf]
      %v246 = vld [vmem:[%s218 + $0x34] sm:$0xf]
      %v247 = vld [vmem:[%s218 + $0x38] sm:$0xf]
      %v248 = vld [vmem:[%s218 + $0x3c] sm:$0xf]
      %v249 = vld [vmem:[%s218 + $0x40] sm:$0xf]
      %v250 = vld [vmem:[%s218 + $0x44] sm:$0xf]
      %v251 = vld [vmem:[%s218 + $0x48] sm:$0xf]
      %v252 = vld [vmem:[%s218 + $0x4c] sm:$0xf]
      %v253 = vld [vmem:[%s218 + $0x50] sm:$0xf]
      %v254 = vld [vmem:[%s218 + $0x54] sm:$0xf]
      %v255 = vld [vmem:[%s218 + $0x58] sm:$0xf]
      %v256 = vld [vmem:[%s218 + $0x5c] sm:$0xf]
      %v257 = vld [vmem:[%s218 + $0x60] sm:$0xf]
      %v258 = vld [vmem:[%s218 + $0x64] sm:$0xf]
      %v259 = vld [vmem:[%s218 + $0x68] sm:$0xf]
      %v260 = vld [vmem:[%s218 + $0x6c] sm:$0xf]
      %v261 = vld [vmem:[%s218 + $0x70] sm:$0xf]
      %v262 = vld [vmem:[%s218 + $0x74] sm:$0xf]
      %v263 = vld [vmem:[%s218 + $0x78] sm:$0xf]
      %v264 = vld [vmem:[%s218 + $0x7c] sm:$0xf]
      %v265 = vld [vmem:[%s1] sm:$0xf]
      %v266 = vld [vmem:[%s1 + $0x4] sm:$0xf]
      %v267 = vld [vmem:[%s1 + $0x8] sm:$0xf]
      %v268 = vld [vmem:[%s1 + $0xc] sm:$0xf]
      %v269 = vld [vmem:[%s1 + $0x10] sm:$0x3]
      %v302 = vunpack.c.l.b16 %v233
      %v303 = vunpack.c.l.b16 %v234
      %v304 = vunpack.c.l.b16 %v235
      %v305 = vunpack.c.l.b16 %v236
      %v306 = vunpack.c.l.b16 %v237
      %v307 = vunpack.c.l.b16 %v238
      %v308 = vunpack.c.l.b16 %v239
      %v309 = vunpack.c.l.b16 %v240
      %v310 = vunpack.c.l.b16 %v241
      %v311 = vunpack.c.l.b16 %v242
      %v312 = vunpack.c.l.b16 %v243
      %v313 = vunpack.c.l.b16 %v244
      %v314 = vunpack.c.l.b16 %v245
      %v315 = vunpack.c.l.b16 %v246
      %v316 = vunpack.c.l.b16 %v247
      %v317 = vunpack.c.l.b16 %v248
      %v318 = vunpack.c.l.b16 %v249
      %v319 = vunpack.c.l.b16 %v250
      %v320 = vunpack.c.l.b16 %v251
      %v321 = vunpack.c.l.b16 %v252
      %v322 = vunpack.c.l.b16 %v253
      %v323 = vunpack.c.l.b16 %v254
      %v324 = vunpack.c.l.b16 %v255
      %v325 = vunpack.c.l.b16 %v256
      %v326 = vunpack.c.l.b16 %v257
      %v327 = vunpack.c.l.b16 %v258
      %v328 = vunpack.c.l.b16 %v259
      %v329 = vunpack.c.l.b16 %v260
      %v330 = vunpack.c.l.b16 %v261
      %v331 = vunpack.c.l.b16 %v262
      %v332 = vunpack.c.l.b16 %v263
      %v333 = vunpack.c.l.b16 %v264
      %v334 = vpack.c.b16 %v303, %v302
      %v335 = vpack.c.b16 %v305, %v304
      %v336 = vpack.c.b16 %v307, %v306
      %v337 = vpack.c.b16 %v309, %v308
      %v338 = vpack.c.b16 %v311, %v310
      %v339 = vpack.c.b16 %v313, %v312
      %v340 = vpack.c.b16 %v315, %v314
      %v341 = vpack.c.b16 %v317, %v316
      %v342 = vpack.c.b16 %v319, %v318
      %v343 = vpack.c.b16 %v321, %v320
      %v344 = vpack.c.b16 %v323, %v322
      %v345 = vpack.c.b16 %v325, %v324
      %v346 = vpack.c.b16 %v327, %v326
      %v347 = vpack.c.b16 %v329, %v328
      %v348 = vpack.c.b16 %v331, %v330
      %v349 = vpack.c.b16 %v333, %v332
      %v355 = vunpack.c.l.b16 %v265
      %v356 = vunpack.c.l.b16 %v266
      %v357 = vunpack.c.l.b16 %v267
      %v358 = vunpack.c.l.b16 %v268
      %v359 = vunpack.c.l.b16 %v269
      %v360 = vpack.c.b16 %v356, %v355
      %v361 = vpack.c.b16 %v358, %v357
      %v362 = vpack.c.b16 %v359, %v359
      %vm365 = vcmask 293888
      %v367 = vsel %vm365, %v334, 0
      %v370 = vsel %vm365, %v335, 0
      %v373 = vsel %vm365, %v336, 0
      %v376 = vsel %vm365, %v337, 0
      %v379 = vsel %vm365, %v338, 0
      %v382 = vsel %vm365, %v339, 0
      %v385 = vsel %vm365, %v340, 0
      %v388 = vsel %vm365, %v341, 0
      %v391 = vsel %vm365, %v342, 0
      %v394 = vsel %vm365, %v343, 0
      %v397 = vsel %vm365, %v344, 0
      %v400 = vsel %vm365, %v345, 0
      %v403 = vsel %vm365, %v346, 0
      %v406 = vsel %vm365, %v347, 0
      %v409 = vsel %vm365, %v348, 0
      %v412 = vsel %vm365, %v349, 0
      %vm414 = vcmask 1041408
      %v416 = vsel %vm414, %v362, 0
      %418 = vmatprep.subr.bf16.mxu0 0
      %419 = vmatpush1.bf16.msra.mxu0 0
      %420 = vmatprep.subr.bf16.mxu0 0
      %421 = vmatpush1.bf16.msra.mxu0 0
      %422 = vmatprep.subr.bf16.mxu0 0
      %423 = vmatpush1.bf16.msra.mxu0 0
      %424 = vmatprep.subr.bf16.mxu0 0
      %425 = vmatpush1.bf16.msra.mxu0 0
      %426 = vmatprep.subr.bf16.mxu0 0
      %427 = vmatpush1.bf16.msra.mxu0 0
      %428 = vmatprep.subr.bf16.mxu0 0
      %429 = vmatpush1.bf16.msra.mxu0 %v416
      %430 = vmatprep.subr.bf16.mxu0 0
      %431 = vmatpush1.bf16.msra.mxu0 %v361
      %432 = vmatprep.subr.bf16.mxu0 0
      %433 = vmatpush1.bf16.msra.mxu0 %v360
      %434 = vmatprep.subr.bf16.mxu0 0
      %435 = vmatpush2.bf16.msra.mxu0 0
      %436 = vmatprep.subr.bf16.mxu0 0
      %437 = vmatpush2.bf16.msra.mxu0 0
      %438 = vmatprep.subr.bf16.mxu0 0
      %439 = vmatpush2.bf16.msra.mxu0 0
      %440 = vmatprep.subr.bf16.mxu0 0
      %441 = vmatpush2.bf16.msra.mxu0 0
      %442 = vmatprep.subr.bf16.mxu0 0
      %443 = vmatpush2.bf16.msra.mxu0 0
      %444 = vmatprep.subr.bf16.mxu0 0
      %445 = vmatpush2.bf16.msra.mxu0 0
      %446 = vmatprep.subr.bf16.mxu0 0
      %447 = vmatpush2.bf16.msra.mxu0 0
      %448 = vmatprep.subr.bf16.mxu0 0
      %449 = vmatpush2.bf16.msra.mxu0 0
      %450 = vmatprep.mubr.bf16.mxu0 0
      %451 = vmatmul.mubr.bf16.gmra.mxu0 %v367
      %v452 = vpop.f32.mrf.mxu0
      %v453 = vadd.f32 0.0, %v452
      %v454 = vpop.f32.mrf.mxu0
      %v455 = vpop.f32.mrf.mxu0
      %v456 = vadd.f32 0.0, %v455
      %v457 = vpop.f32.mrf.mxu0
      %458 = vmatprep.mubr.bf16.mxu0 0
      %459 = vmatmul.mubr.bf16.gmra.mxu0 %v370
      %v460 = vpop.f32.mrf.mxu0
      %v461 = vadd.f32 0.0, %v460
      %v462 = vpop.f32.mrf.mxu0
      %v463 = vpop.f32.mrf.mxu0
      %v464 = vadd.f32 0.0, %v463
      %v465 = vpop.f32.mrf.mxu0
      %466 = vmatprep.mubr.bf16.mxu0 0
      %467 = vmatmul.mubr.bf16.gmra.mxu0 %v373
      %v468 = vpop.f32.mrf.mxu0
      %v469 = vadd.f32 0.0, %v468
      %v470 = vpop.f32.mrf.mxu0
      %v471 = vpop.f32.mrf.mxu0
      %v472 = vadd.f32 0.0, %v471
      %v473 = vpop.f32.mrf.mxu0
      %474 = vmatprep.mubr.bf16.mxu0 0
      %475 = vmatmul.mubr.bf16.gmra.mxu0 %v376
      %v476 = vpop.f32.mrf.mxu0
      %v477 = vadd.f32 0.0, %v476
      %v478 = vpop.f32.mrf.mxu0
      %v479 = vpop.f32.mrf.mxu0
      %v480 = vadd.f32 0.0, %v479
      %v481 = vpop.f32.mrf.mxu0
      %482 = vmatprep.mubr.bf16.mxu0 0
      %483 = vmatmul.mubr.bf16.gmra.mxu0 %v379
      %v484 = vpop.f32.mrf.mxu0
      %v485 = vadd.f32 0.0, %v484
      %v486 = vpop.f32.mrf.mxu0
      %v487 = vpop.f32.mrf.mxu0
      %v488 = vadd.f32 0.0, %v487
      %v489 = vpop.f32.mrf.mxu0
      %490 = vmatprep.mubr.bf16.mxu0 0
      %491 = vmatmul.mubr.bf16.gmra.mxu0 %v382
      %v492 = vpop.f32.mrf.mxu0
      %v493 = vadd.f32 0.0, %v492
      %v494 = vpop.f32.mrf.mxu0
      %v495 = vpop.f32.mrf.mxu0
      %v496 = vadd.f32 0.0, %v495
      %v497 = vpop.f32.mrf.mxu0
      %498 = vmatprep.mubr.bf16.mxu0 0
      %499 = vmatmul.mubr.bf16.gmra.mxu0 %v385
      %v500 = vpop.f32.mrf.mxu0
      %v501 = vadd.f32 0.0, %v500
      %v502 = vpop.f32.mrf.mxu0
      %v503 = vpop.f32.mrf.mxu0
      %v504 = vadd.f32 0.0, %v503
      %v505 = vpop.f32.mrf.mxu0
      %506 = vmatprep.mubr.bf16.mxu0 0
      %507 = vmatmul.mubr.bf16.gmra.mxu0 %v388
      %v508 = vpop.f32.mrf.mxu0
      %v509 = vadd.f32 0.0, %v508
      %v510 = vpop.f32.mrf.mxu0
      %v511 = vpop.f32.mrf.mxu0
      %v512 = vadd.f32 0.0, %v511
      %v513 = vpop.f32.mrf.mxu0
      %514 = vmatprep.mubr.bf16.mxu0 0
      %515 = vmatmul.mubr.bf16.gmra.mxu0 %v391
      %v516 = vpop.f32.mrf.mxu0
      %v517 = vadd.f32 0.0, %v516
      %v518 = vpop.f32.mrf.mxu0
      %v519 = vpop.f32.mrf.mxu0
      %v520 = vadd.f32 0.0, %v519
      %v521 = vpop.f32.mrf.mxu0
      %522 = vmatprep.mubr.bf16.mxu0 0
      %523 = vmatmul.mubr.bf16.gmra.mxu0 %v394
      %v524 = vpop.f32.mrf.mxu0
      %v525 = vadd.f32 0.0, %v524
      %v526 = vpop.f32.mrf.mxu0
      %v527 = vpop.f32.mrf.mxu0
      %v528 = vadd.f32 0.0, %v527
      %v529 = vpop.f32.mrf.mxu0
      %530 = vmatprep.mubr.bf16.mxu0 0
      %531 = vmatmul.mubr.bf16.gmra.mxu0 %v397
      %v532 = vpop.f32.mrf.mxu0
      %v533 = vadd.f32 0.0, %v532
      %v534 = vpop.f32.mrf.mxu0
      %v535 = vpop.f32.mrf.mxu0
      %v536 = vadd.f32 0.0, %v535
      %v537 = vpop.f32.mrf.mxu0
      %538 = vmatprep.mubr.bf16.mxu0 0
      %539 = vmatmul.mubr.bf16.gmra.mxu0 %v400
      %v540 = vpop.f32.mrf.mxu0
      %v541 = vadd.f32 0.0, %v540
      %v542 = vpop.f32.mrf.mxu0
      %v543 = vpop.f32.mrf.mxu0
      %v544 = vadd.f32 0.0, %v543
      %v545 = vpop.f32.mrf.mxu0
      %546 = vmatprep.mubr.bf16.mxu0 0
      %547 = vmatmul.mubr.bf16.gmra.mxu0 %v403
      %v548 = vpop.f32.mrf.mxu0
      %v549 = vadd.f32 0.0, %v548
      %v550 = vpop.f32.mrf.mxu0
      %v551 = vpop.f32.mrf.mxu0
      %v552 = vadd.f32 0.0, %v551
      %v553 = vpop.f32.mrf.mxu0
      %554 = vmatprep.mubr.bf16.mxu0 0
      %555 = vmatmul.mubr.bf16.gmra.mxu0 %v406
      %v556 = vpop.f32.mrf.mxu0
      %v557 = vadd.f32 0.0, %v556
      %v558 = vpop.f32.mrf.mxu0
      %v559 = vpop.f32.mrf.mxu0
      %v560 = vadd.f32 0.0, %v559
      %v561 = vpop.f32.mrf.mxu0
      %562 = vmatprep.mubr.bf16.mxu0 0
      %563 = vmatmul.mubr.bf16.gmra.mxu0 %v409
      %v564 = vpop.f32.mrf.mxu0
      %v565 = vadd.f32 0.0, %v564
      %v566 = vpop.f32.mrf.mxu0
      %v567 = vpop.f32.mrf.mxu0
      %v568 = vadd.f32 0.0, %v567
      %v569 = vpop.f32.mrf.mxu0
      %570 = vmatprep.mubr.bf16.mxu0 0
      %571 = vmatmul.mubr.bf16.gmra.mxu0 %v412
      %v572 = vpop.f32.mrf.mxu0
      %v573 = vadd.f32 0.0, %v572
      %v574 = vpop.f32.mrf.mxu0
      %v575 = vpop.f32.mrf.mxu0
      %v576 = vadd.f32 0.0, %v575
      %v577 = vpop.f32.mrf.mxu0
      %578 = vdwg.mxu0
      %579 = vst [vmem:[%s224] sm:$0xff] %v453
      %580 = vst [vmem:[%s224 + $0x8] sm:$0xff] %v456
      %581 = vst [vmem:[%s224 + $0x10] sm:$0xff] %v461
      %582 = vst [vmem:[%s224 + $0x18] sm:$0xff] %v464
      %583 = vst [vmem:[%s224 + $0x20] sm:$0xff] %v469
      %584 = vst [vmem:[%s224 + $0x28] sm:$0xff] %v472
      %585 = vst [vmem:[%s224 + $0x30] sm:$0xff] %v477
      %586 = vst [vmem:[%s224 + $0x38] sm:$0xff] %v480
      %587 = vst [vmem:[%s224 + $0x40] sm:$0xff] %v485
      %588 = vst [vmem:[%s224 + $0x48] sm:$0xff] %v488
      %589 = vst [vmem:[%s224 + $0x50] sm:$0xff] %v493
      %590 = vst [vmem:[%s224 + $0x58] sm:$0xff] %v496
      %591 = vst [vmem:[%s224 + $0x60] sm:$0xff] %v501
      %592 = vst [vmem:[%s224 + $0x68] sm:$0xff] %v504
      %593 = vst [vmem:[%s224 + $0x70] sm:$0xff] %v509
      %594 = vst [vmem:[%s224 + $0x78] sm:$0xff] %v512
      %595 = vst [vmem:[%s224 + $0x80] sm:$0xff] %v517
      %596 = vst [vmem:[%s224 + $0x88] sm:$0xff] %v520
      %597 = vst [vmem:[%s224 + $0x90] sm:$0xff] %v525
      %598 = vst [vmem:[%s224 + $0x98] sm:$0xff] %v528
      %599 = vst [vmem:[%s224 + $0xa0] sm:$0xff] %v533
      %600 = vst [vmem:[%s224 + $0xa8] sm:$0xff] %v536
      %601 = vst [vmem:[%s224 + $0xb0] sm:$0xff] %v541
      %602 = vst [vmem:[%s224 + $0xb8] sm:$0xff] %v544
      %603 = vst [vmem:[%s224 + $0xc0] sm:$0xff] %v549
      %604 = vst [vmem:[%s224 + $0xc8] sm:$0xff] %v552
      %605 = vst [vmem:[%s224 + $0xd0] sm:$0xff] %v557
      %606 = vst [vmem:[%s224 + $0xd8] sm:$0xff] %v560
      %607 = vst [vmem:[%s224 + $0xe0] sm:$0xff] %v565
      %608 = vst [vmem:[%s224 + $0xe8] sm:$0xff] %v568
      %609 = vst [vmem:[%s224 + $0xf0] sm:$0xff] %v573
      %610 = vst [vmem:[%s224 + $0xf8] sm:$0xff] %v576
      %v611 = vld [vmem:[#allocation2] sm:$0x1]
      %v612 = vadd.f32 %v453, %v456
      %v613 = vadd.f32 %v612, %v461
      %v614 = vadd.f32 %v613, %v464
      %v615 = vadd.f32 %v614, %v469
      %v616 = vadd.f32 %v615, %v472
      %v617 = vadd.f32 %v616, %v477
      %v618 = vadd.f32 %v617, %v480
      %v619 = vadd.f32 %v618, %v485
      %v620 = vadd.f32 %v619, %v488
      %v621 = vadd.f32 %v620, %v493
      %v622 = vadd.f32 %v621, %v496
      %v623 = vadd.f32 %v622, %v501
      %v624 = vadd.f32 %v623, %v504
      %v625 = vadd.f32 %v624, %v509
      %v626 = vadd.f32 %v625, %v512
      %v627 = vadd.f32 %v626, %v517
      %v628 = vadd.f32 %v627, %v520
      %v629 = vadd.f32 %v628, %v525
      %v630 = vadd.f32 %v629, %v528
      %v631 = vadd.f32 %v630, %v533
      %v632 = vadd.f32 %v631, %v536
      %v633 = vadd.f32 %v632, %v541
      %v634 = vadd.f32 %v633, %v544
      %v635 = vadd.f32 %v634, %v549
      %v636 = vadd.f32 %v635, %v552
      %v637 = vadd.f32 %v636, %v557
      %v638 = vadd.f32 %v637, %v560
      %v639 = vadd.f32 %v638, %v565
      %v640 = vadd.f32 %v639, %v568
      %v641 = vadd.f32 %v640, %v573
      %v642 = vadd.f32 %v641, %v576
      %v643 = vrot.slane %v642, 4
      %v644 = vadd.f32 %v642, %v643
      %v645 = vrot.slane %v644, 2
      %v646 = vadd.f32 %v644, %v645
      %v647 = vrot.slane %v646, 1
      %v648 = vadd.f32 %v646, %v647
      %v649 = vadd.f32 %v611, %v648
      %650 = vst [vmem:[#allocation2] sm:$0x1] %v649
      %v651 = vld [vmem:[#allocation3] sm:$0x1]
      %v652 = vmul.f32 %v453, %v453
      %v653 = vmul.f32 %v456, %v456
      %v654 = vmul.f32 %v461, %v461
      %v655 = vmul.f32 %v464, %v464
      %v656 = vmul.f32 %v469, %v469
      %v657 = vmul.f32 %v472, %v472
      %v658 = vmul.f32 %v477, %v477
      %v659 = vmul.f32 %v480, %v480
      %v660 = vmul.f32 %v485, %v485
      %v661 = vmul.f32 %v488, %v488
      %v662 = vmul.f32 %v493, %v493
      %v663 = vmul.f32 %v496, %v496
      %v664 = vmul.f32 %v501, %v501
      %v665 = vmul.f32 %v504, %v504
      %v666 = vmul.f32 %v509, %v509
      %v667 = vmul.f32 %v512, %v512
      %v668 = vmul.f32 %v517, %v517
      %v669 = vmul.f32 %v520, %v520
      %v670 = vmul.f32 %v525, %v525
      %v671 = vmul.f32 %v528, %v528
      %v672 = vmul.f32 %v533, %v533
      %v673 = vmul.f32 %v536, %v536
      %v674 = vmul.f32 %v541, %v541
      %v675 = vmul.f32 %v544, %v544
      %v676 = vmul.f32 %v549, %v549
      %v677 = vmul.f32 %v552, %v552
      %v678 = vmul.f32 %v557, %v557
      %v679 = vmul.f32 %v560, %v560
      %v680 = vmul.f32 %v565, %v565
      %v681 = vmul.f32 %v568, %v568
      %v682 = vmul.f32 %v573, %v573
      %v683 = vmul.f32 %v576, %v576
      %v684 = vadd.f32 %v652, %v653
      %v685 = vadd.f32 %v684, %v654
      %v686 = vadd.f32 %v685, %v655
      %v687 = vadd.f32 %v686, %v656
      %v688 = vadd.f32 %v687, %v657
      %v689 = vadd.f32 %v688, %v658
      %v690 = vadd.f32 %v689, %v659
      %v691 = vadd.f32 %v690, %v660
      %v692 = vadd.f32 %v691, %v661
      %v693 = vadd.f32 %v692, %v662
      %v694 = vadd.f32 %v693, %v663
      %v695 = vadd.f32 %v694, %v664
      %v696 = vadd.f32 %v695, %v665
      %v697 = vadd.f32 %v696, %v666
      %v698 = vadd.f32 %v697, %v667
      %v699 = vadd.f32 %v698, %v668
      %v700 = vadd.f32 %v699, %v669
      %v701 = vadd.f32 %v700, %v670
      %v702 = vadd.f32 %v701, %v671
      %v703 = vadd.f32 %v702, %v672
      %v704 = vadd.f32 %v703, %v673
      %v705 = vadd.f32 %v704, %v674
      %v706 = vadd.f32 %v705, %v675
      %v707 = vadd.f32 %v706, %v676
      %v708 = vadd.f32 %v707, %v677
      %v709 = vadd.f32 %v708, %v678
      %v710 = vadd.f32 %v709, %v679
      %v711 = vadd.f32 %v710, %v680
      %v712 = vadd.f32 %v711, %v681
      %v713 = vadd.f32 %v712, %v682
      %v714 = vadd.f32 %v713, %v683
      %v715 = vrot.slane %v714, 4
      %v716 = vadd.f32 %v714, %v715
      %v717 = vrot.slane %v716, 2
      %v718 = vadd.f32 %v716, %v717
      %v719 = vrot.slane %v718, 1
      %v720 = vadd.f32 %v718, %v719
      %v721 = vadd.f32 %v651, %v720
      %722 = vst [vmem:[#allocation3] sm:$0x1] %v721
      %p723 = scmp.eq.s32.totalorder %s17, 1
      // Predicated region
      $region41: #{single_conv.2} parent=35 // pred_check
        %p724 = pneg %p723
      $region42: #{single_conv.2} parent=35 // pred_check_branch
        %726 = sbr.rel (%p724) target = $region44
      $region43: #{single_conv.2} parent=35 // pred_region
        %v727 = vld [vmem:[#allocation2] sm:$0x1]
        %v728 = vmul.f32 %v727, 0.001953125
        %v729 = vld [vmem:[#allocation3] sm:$0x1]
        %v730 = vmul.f32 %v729, 0.001953125
        %v731 = vmul.f32 %v728, %v728
        %v732 = vsub.f32 %v730, %v731
        %v733 = vmax.f32 %v732, 0.0
        %v734 = vld [vmem:[%s2] sm:$0x1]
        %v735 = vadd.f32 %v733, 1e-05
        %v736 = vrsqrt.pop %v735
        %v737 = vmul.f32 %v734, %v736
        %v738 = vld [vmem:[%s3] sm:$0x1]
        %v739 = vmul.f32 %v728, %v737
        %v740 = vsub.f32 %v738, %v739
        %v742 = vlaneseq
        %v743 = vshrl.u32 %v742, 7
        %v744 = vsub.s32 0, %v743
        %v745 = vrot.slane %v740, %v744
        %vm747 = vcmask 1040384
        %v748 = vsel %vm747, %v737, %v745
        %749 = vst [vmem:[%s5] sm:$0x3] %v748
      $region44: #{single_conv.2} parent=35 // pred_fallthru
        _
      %s750 = smul.u32 32, %s17
      %p751 = scmp.lt.s32.totalorder %s750, 63
      %s752 = scalar_select %p751, %s750, 63
      %s753 = smul.addr %s752, 8
      %s754 = scalar_lea.vmem %s4, %s753
      // Predicated region
      $region45: #{single_conv.2} parent=35 // pred_check
        %p755 = pneg %p124
      $region46: #{single_conv.2} parent=35 // pred_check_branch
        %757 = sbr.rel (%p755) target = $region48
      $region47: #{single_conv.2} parent=35 // pred_region
        %s758 = smul.u32 32, %s17
      $region48: #{single_conv.2} parent=35 // pred_fallthru
        _
      // Predicated region
      $region49: #{single_conv.2} parent=35 // pred_check
        %p759 = pneg %p145
      $region50: #{single_conv.2} parent=35 // pred_check_branch
        %761 = sbr.rel (%p759) target = $region52
      $region51: #{single_conv.2} parent=35 // pred_region
        _
      $region52: #{single_conv.2} parent=35 // pred_fallthru
        _
      // Predicated region
      $region53: #{single_conv.2} parent=35 // pred_check
        %p762 = pneg %p145
      $region54: #{single_conv.2} parent=35 // pred_check_branch
        %764 = sbr.rel (%p762) target = $region56
      $region55: #{single_conv.2} parent=35 // pred_region
        _
      $region56: #{single_conv.2} parent=35 // pred_fallthru
        _
    $region36: #{single_conv.2} parent=5 // pred_fallthru
      _
    %p765 = scmp.le.s32.totalorder 2, %s12
    // Predicated region
    $region57: #{single_conv.2} parent=5 // pred_check
      %p766 = pneg %p765
    $region58: #{single_conv.2} parent=5 // pred_check_branch
      %768 = sbr.rel (%p766) target = $region60
    $region59: #{single_conv.2} parent=5 // pred_region
      %s769 = ssub.s32 %s12, 2
      // Predicated region
      $region61: #{single_conv.2} parent=59 // pred_check
        %p770 = pneg %p130
      $region62: #{single_conv.2} parent=59 // pred_check_branch
        %772 = sbr.rel (%p770) target = $region64
      $region63: #{single_conv.2} parent=59 // pred_region
        %s773 = smul.u32 32, %s18
        %p774 = scmp.lt.s32.totalorder %s773, 63
        %s775 = scalar_select %p774, %s773, 63
        %s776 = smul.addr %s775, 8
        %s777 = scalar_lea.vmem %s4, %s776
      $region64: #{single_conv.2} parent=59 // pred_fallthru
        _
    $region60: #{single_conv.2} parent=5 // pred_fallthru
      _
  $region6: #{single_conv.2} parent=0 // loop_footer
    %s16 = sadd.s32 1, %s12
  $region7: #{single_conv.2} parent=0 // loop_footer_branch
    %11 = sbr.rel target = $region3
  $region8: #{single_conv.2} parent=0 // loop_exit
    _

</llo_original>
